<compile_context>
chip_gen: v7x
topology: tpu7x:2x2x1
jax: 0.10.0
libtpu: 0.0.40
codegen_flags: <defaults>
</compile_context>

<pallas_src>
import jax
import jax.numpy as jnp
from jax.experimental import pallas as pl
from jax.experimental.pallas import tpu as pltpu


def bahdanau_kernel(q_ref, k_ref,
                    wq_ref, bq_ref,
                    wkv_ref, bkv_ref,
                    wp_ref, bp_ref,
                    ctx_ref, attn_ref):
    TB, S, K = k_ref.shape
    H = wq_ref.shape[1]

    q = q_ref[...]                                    # (TB, Q)
    k = k_ref[...].reshape(TB * S, K)                 # fold batch into matmul M dim

    # Query projection: (TB, H)
    qp = jnp.dot(q, wq_ref[...], preferred_element_type=jnp.float32) + bq_ref[...]

    # Fused key+value projection: one (TB*S, K) @ (K, 2H) MXU matmul.
    kv = jnp.dot(k, wkv_ref[...], preferred_element_type=jnp.float32) + bkv_ref[...]
    kv = kv.reshape(TB, S, 2 * H)
    kp = kv[:, :, :H]                                 # (TB, S, H) key projection
    vals = kv[:, :, H:]                               # (TB, S, H) value projection

    # score = tanh(query_proj + key_proj): (TB, S, H)  (tanh -> EUP)
    score = jnp.tanh(qp[:, None, :] + kp)

    # Logits via VPU multiply + XLU lane reduce over H (avoids an N=1 MXU matmul);
    # the result is a lane-dense (TB, S) tile.  bp is constant over the softmax
    # axis (kept only for logit fidelity; it cancels in the softmax).
    logits = jnp.sum(score * wp_ref[...][None, :, :], axis=-1) + bp_ref[...]

    # Softmax over the sequence (lane) axis.
    m = jnp.max(logits, axis=-1, keepdims=True)       # (TB, 1)
    e = jnp.exp(logits - m)                           # (TB, S)
    denom = jnp.sum(e, axis=-1, keepdims=True)        # (TB, 1)
    w = e * pl.reciprocal(denom, approx=True)         # (TB, S)

    # context_b = w_b @ vals_b : batched (1,S) @ (S,H) -> (TB, H)
    ctx = jnp.einsum('bqs,bsh->bqh', w[:, None, :], vals,
                     preferred_element_type=jnp.float32)[:, 0, :]

    ctx_ref[...] = ctx.astype(ctx_ref.dtype)
    attn_ref[...] = w.astype(attn_ref.dtype)          # lane-dense (TB, S) store


def bahdanau_attention(query, key, params, *, block_b=None):
    B, Q = query.shape
    Bk, S, K = key.shape
    assert Bk == B
    H = params["wq"].shape[1]

    # Parameter prep.
    wq = params["wq"].astype(jnp.float32)
    bq = params["bq"].reshape(1, H).astype(jnp.float32)
    # Fuse key / value projection weights into a single (K, 2H) operand.
    wkv = jnp.concatenate([params["wk"], params["wv"]], axis=1).astype(jnp.float32)
    bkv = jnp.concatenate([params["bk"], params["bv"]]).reshape(1, 2 * H).astype(jnp.float32)
    wp = params["wp"].reshape(1, H).astype(jnp.float32)   # (H, 1) -> row (1, H)
    bp = params["bp"].reshape(1, 1).astype(jnp.float32)

    # Batch tiling: whole batch in one grid step for small B; 128-row tiles
    # (multiple of 8 sublanes, and >=2 parallel steps for the v7x megacore)
    # for large B.  At these tile sizes the double-buffered key block stays far
    # below the scoped-VMEM default, so no vmem_limit_bytes override is needed.
    if block_b is None:
        block_b = B if B <= 128 else 128
    n_blocks = pl.cdiv(B, block_b)
    Bp = n_blocks * block_b
    if Bp != B:  # pad batch so the grid tiles it evenly; padded rows are discarded
        query = jnp.pad(query, ((0, Bp - B), (0, 0)))
        key = jnp.pad(key, ((0, Bp - B), (0, 0), (0, 0)))

    query = query.astype(jnp.float32)
    key = key.astype(jnp.float32)

    rep = lambda shape: pl.BlockSpec(shape, lambda b: tuple(0 for _ in shape))

    grid_spec = pltpu.PrefetchScalarGridSpec(
        num_scalar_prefetch=0,
        grid=(n_blocks,),
        in_specs=[
            pl.BlockSpec((block_b, Q), lambda b: (b, 0)),        # query tile
            pl.BlockSpec((block_b, S, K), lambda b: (b, 0, 0)),  # key tile
            rep((Q, H)), rep((1, H)),                            # Wq, bq
            rep((K, 2 * H)), rep((1, 2 * H)),                    # fused W_kv, b_kv
            rep((1, H)), rep((1, 1)),                            # wp row, bp
        ],
        out_specs=[
            pl.BlockSpec((block_b, H), lambda b: (b, 0)),        # context
            pl.BlockSpec((block_b, S), lambda b: (b, 0)),        # attn (lane-dense)
        ],
    )

    out_shapes = (
        jax.ShapeDtypeStruct((Bp, H), jnp.float32),
        jax.ShapeDtypeStruct((Bp, S), jnp.float32),
    )

    ctx, attn = pl.pallas_call(
        bahdanau_kernel,
        out_shape=out_shapes,
        grid_spec=grid_spec,
        compiler_params=pltpu.CompilerParams(
            dimension_semantics=("parallel",)),
    )(query, key, wq, bq, wkv, bkv, wp, bp)

    # Match PyTorch output shapes: context (B, H), attention weights (B, S, 1).
    return ctx[:B], attn[:B, :, None]


def reference(query, key, params):
    qp = query[:, None, :] @ params["wq"] + params["bq"]          # (B,1,H)
    kp = key @ params["wk"] + params["bk"]                        # (B,S,H)
    vals = key @ params["wv"] + params["bv"]                      # (B,S,H)
    score = jnp.tanh(qp + kp)
    logits = score @ params["wp"] + params["bp"]                  # (B,S,1)
    w = jax.nn.softmax(logits, axis=1)
    ctx = jnp.sum(w * vals, axis=1)
    return ctx, w


if __name__ == "__main__":
    # Small shapes implied by the module's forward pass.
    B, S = 2, 8
    query_dim, key_dim, hidden_dim = 16, 16, 32

    key_rng = jax.random.PRNGKey(0)
    ks = jax.random.split(key_rng, 10)

    query = jax.random.normal(ks[0], (B, query_dim), dtype=jnp.float32)
    key = jax.random.normal(ks[1], (B, S, key_dim), dtype=jnp.float32)

    # Deterministic parameter init (shapes from nn.Linear in __init__).
    params = {
        "wq": jax.random.normal(ks[2], (query_dim, hidden_dim), jnp.float32) * 0.1,
        "bq": jax.random.normal(ks[3], (hidden_dim,), jnp.float32) * 0.1,
        "wk": jax.random.normal(ks[4], (key_dim, hidden_dim), jnp.float32) * 0.1,
        "bk": jax.random.normal(ks[5], (hidden_dim,), jnp.float32) * 0.1,
        "wv": jax.random.normal(ks[6], (key_dim, hidden_dim), jnp.float32) * 0.1,
        "bv": jax.random.normal(ks[7], (hidden_dim,), jnp.float32) * 0.1,
        "wp": jax.random.normal(ks[8], (hidden_dim, 1), jnp.float32) * 0.1,
        "bp": jax.random.normal(ks[9], (1,), jnp.float32) * 0.1,
    }

    ctx, attn = bahdanau_attention(query, key, params)
    jax.block_until_ready((ctx, attn))

    ctx_ref, attn_ref = reference(query, key, params)
    assert ctx.shape == (B, hidden_dim) and attn.shape == (B, S, 1)
    # Tolerance relaxed vs. 1e-5 because the softmax denominator uses the EUP
    # approximate reciprocal (relative error ~1e-4); still well within 1e-3.
    assert jnp.allclose(ctx, ctx_ref, atol=1e-3, rtol=1e-3)
    assert jnp.allclose(attn, attn_ref, atol=1e-3, rtol=1e-3)

    print("KERNEL_OK")
</pallas_src>

<mosaic_0001>
module attributes {stable_mosaic.version = 11 : i64} {
  func.func @bahdanau_kernel(%arg0: i32, %arg1: memref<2x16xf32, #tpu.memory_space<vmem>>, %arg2: memref<2x8x16xf32, #tpu.memory_space<vmem>>, %arg3: memref<16x32xf32, #tpu.memory_space<vmem>>, %arg4: memref<1x32xf32, #tpu.memory_space<vmem>>, %arg5: memref<16x64xf32, #tpu.memory_space<vmem>>, %arg6: memref<1x64xf32, #tpu.memory_space<vmem>>, %arg7: memref<1x32xf32, #tpu.memory_space<vmem>>, %arg8: memref<1x1xf32, #tpu.memory_space<vmem>>, %arg9: memref<2x32xf32, #tpu.memory_space<vmem>>, %arg10: memref<2x8xf32, #tpu.memory_space<vmem>>) attributes {dimension_semantics = [#tpu.dimension_semantics<parallel>], iteration_bounds = array<i64: 1>, scalar_prefetch = 0 : i64, scratch_operands = 0 : i64, tpu.core_type = #tpu.core_type<tc>, window_params = [{transform_indices = @transform_0, window_bounds = array<i64: 2, 16>}, {transform_indices = @transform_1, window_bounds = array<i64: 2, 8, 16>}, {pipeline_mode = #tpu.pipeline_mode<synchronous>, transform_indices = @transform_2, window_bounds = array<i64: 16, 32>}, {pipeline_mode = #tpu.pipeline_mode<synchronous>, transform_indices = @transform_3, window_bounds = array<i64: 1, 32>}, {pipeline_mode = #tpu.pipeline_mode<synchronous>, transform_indices = @transform_4, window_bounds = array<i64: 16, 64>}, {pipeline_mode = #tpu.pipeline_mode<synchronous>, transform_indices = @transform_5, window_bounds = array<i64: 1, 64>}, {pipeline_mode = #tpu.pipeline_mode<synchronous>, transform_indices = @transform_6, window_bounds = array<i64: 1, 32>}, {pipeline_mode = #tpu.pipeline_mode<synchronous>, transform_indices = @transform_7, window_bounds = array<i64: 1, 1>}, {transform_indices = @transform_8, window_bounds = array<i64: 2, 32>}, {transform_indices = @transform_9, window_bounds = array<i64: 2, 8>}]} {
    %c0 = arith.constant 0 : index
    %c0_0 = arith.constant 0 : index
    %0 = vector.load %arg1[%c0, %c0_0] : memref<2x16xf32, #tpu.memory_space<vmem>>, vector<2x16xf32>
    %c0_1 = arith.constant 0 : index
    %c0_2 = arith.constant 0 : index
    %c0_3 = arith.constant 0 : index
    %1 = vector.load %arg2[%c0_1, %c0_2, %c0_3] : memref<2x8x16xf32, #tpu.memory_space<vmem>>, vector<2x8x16xf32>
    %2 = vector.shape_cast %1 : vector<2x8x16xf32> to vector<16x16xf32>
    %c0_4 = arith.constant 0 : index
    %c0_5 = arith.constant 0 : index
    %3 = vector.load %arg3[%c0_4, %c0_5] : memref<16x32xf32, #tpu.memory_space<vmem>>, vector<16x32xf32>
    %cst = arith.constant dense<0.000000e+00> : vector<2x32xf32>
    %4 = tpu.matmul %0, %3, %cst {dimension_numbers = #tpu.dot_dimension_numbers<[1], [0], [0], [1], [0, 0, 1, 1], [], []>} : vector<2x16xf32>, vector<16x32xf32>, vector<2x32xf32> -> vector<2x32xf32>
    %c0_6 = arith.constant 0 : index
    %c0_7 = arith.constant 0 : index
    %5 = vector.load %arg4[%c0_6, %c0_7] : memref<1x32xf32, #tpu.memory_space<vmem>>, vector<1x32xf32>
    %6 = vector.broadcast %5 : vector<1x32xf32> to vector<2x32xf32>
    %7 = arith.addf %4, %6 : vector<2x32xf32>
    %c0_8 = arith.constant 0 : index
    %c0_9 = arith.constant 0 : index
    %8 = vector.load %arg5[%c0_8, %c0_9] : memref<16x64xf32, #tpu.memory_space<vmem>>, vector<16x64xf32>
    %cst_10 = arith.constant dense<0.000000e+00> : vector<16x64xf32>
    %9 = tpu.matmul %2, %8, %cst_10 {dimension_numbers = #tpu.dot_dimension_numbers<[1], [0], [0], [1], [0, 0, 1, 1], [], []>} : vector<16x16xf32>, vector<16x64xf32>, vector<16x64xf32> -> vector<16x64xf32>
    %c0_11 = arith.constant 0 : index
    %c0_12 = arith.constant 0 : index
    %10 = vector.load %arg6[%c0_11, %c0_12] : memref<1x64xf32, #tpu.memory_space<vmem>>, vector<1x64xf32>
    %11 = vector.broadcast %10 : vector<1x64xf32> to vector<16x64xf32>
    %12 = arith.addf %9, %11 : vector<16x64xf32>
    %13 = vector.shape_cast %12 : vector<16x64xf32> to vector<2x8x64xf32>
    %14 = vector.extract_strided_slice %13 {offsets = [0, 0, 0], sizes = [2, 8, 32], strides = [1, 1, 1]} : vector<2x8x64xf32> to vector<2x8x32xf32>
    %15 = vector.extract_strided_slice %13 {offsets = [0, 0, 32], sizes = [2, 8, 32], strides = [1, 1, 1]} : vector<2x8x64xf32> to vector<2x8x32xf32>
    %16 = vector.shape_cast %7 : vector<2x32xf32> to vector<2x1x32xf32>
    %17 = vector.broadcast %16 : vector<2x1x32xf32> to vector<2x8x32xf32>
    %18 = arith.addf %17, %14 : vector<2x8x32xf32>
    %19 = math.tanh %18 : vector<2x8x32xf32>
    %c0_13 = arith.constant 0 : index
    %c0_14 = arith.constant 0 : index
    %20 = vector.load %arg7[%c0_13, %c0_14] : memref<1x32xf32, #tpu.memory_space<vmem>>, vector<1x32xf32>
    %21 = vector.shape_cast %20 : vector<1x32xf32> to vector<1x1x32xf32>
    %22 = vector.broadcast %21 : vector<1x1x32xf32> to vector<2x8x32xf32>
    %23 = arith.mulf %19, %22 : vector<2x8x32xf32>
    %cst_15 = arith.constant dense<0.000000e+00> : vector<2x8xf32>
    %24 = vector.multi_reduction <add>, %23, %cst_15 [2] : vector<2x8x32xf32> to vector<2x8xf32>
    %c0_16 = arith.constant 0 : index
    %c0_17 = arith.constant 0 : index
    %25 = vector.load %arg8[%c0_16, %c0_17] : memref<1x1xf32, #tpu.memory_space<vmem>>, vector<1x1xf32>
    %26 = vector.broadcast %25 : vector<1x1xf32> to vector<2x8xf32>
    %27 = arith.addf %24, %26 : vector<2x8xf32>
    %cst_18 = arith.constant dense<0xFF800000> : vector<2xf32>
    %28 = vector.multi_reduction <maximumf>, %27, %cst_18 [1] : vector<2x8xf32> to vector<2xf32>
    %29 = vector.shape_cast %28 : vector<2xf32> to vector<2x1xf32>
    %30 = vector.broadcast %29 : vector<2x1xf32> to vector<2x8xf32>
    %31 = arith.subf %27, %30 : vector<2x8xf32>
    %32 = math.exp %31 : vector<2x8xf32>
    %cst_19 = arith.constant dense<0.000000e+00> : vector<2xf32>
    %33 = vector.multi_reduction <add>, %32, %cst_19 [1] : vector<2x8xf32> to vector<2xf32>
    %34 = vector.shape_cast %33 : vector<2xf32> to vector<2x1xf32>
    %35 = tpu.reciprocal %34 {approx = true} : vector<2x1xf32> -> vector<2x1xf32>
    %36 = vector.broadcast %35 : vector<2x1xf32> to vector<2x8xf32>
    %37 = arith.mulf %32, %36 : vector<2x8xf32>
    %38 = vector.shape_cast %37 : vector<2x8xf32> to vector<2x1x8xf32>
    "tpu.trace_start"() <{level = 10 : i32, message = "bqs,bsh->bqh"}> : () -> ()
    %cst_20 = arith.constant dense<0.000000e+00> : vector<2x1x32xf32>
    %39 = tpu.matmul %38, %15, %cst_20 {dimension_numbers = #tpu.dot_dimension_numbers<[2], [1], [1], [2], [0, 0, 0, 1, 1, 2], [0], [0]>} : vector<2x1x8xf32>, vector<2x8x32xf32>, vector<2x1x32xf32> -> vector<2x1x32xf32>
    "tpu.trace_stop"() : () -> ()
    %40 = vector.shape_cast %39 : vector<2x1x32xf32> to vector<2x32xf32>
    %c0_21 = arith.constant 0 : index
    %c0_22 = arith.constant 0 : index
    %41 = vector.load %arg9[%c0_21, %c0_22] : memref<2x32xf32, #tpu.memory_space<vmem>>, vector<2x32xf32>
    tpu.vector_store %arg9[%c0_21, %c0_22], %40 {strides = array<i32>} : memref<2x32xf32, #tpu.memory_space<vmem>>, vector<2x32xf32>,
    %c0_23 = arith.constant 0 : index
    %c0_24 = arith.constant 0 : index
    %42 = vector.load %arg10[%c0_23, %c0_24] : memref<2x8xf32, #tpu.memory_space<vmem>>, vector<2x8xf32>
    tpu.vector_store %arg10[%c0_23, %c0_24], %37 {strides = array<i32>} : memref<2x8xf32, #tpu.memory_space<vmem>>, vector<2x8xf32>,
    return
  }
  func.func @transform_0(%arg0: i32) -> (i32, i32) {
    %c0_i32 = arith.constant 0 : i32
    %c0_i32_0 = arith.constant 0 : i32
    return %arg0, %c0_i32 : i32, i32
  }
  func.func @transform_1(%arg0: i32) -> (i32, i32, i32) {
    %c0_i32 = arith.constant 0 : i32
    %c0_i32_0 = arith.constant 0 : i32
    %c0_i32_1 = arith.constant 0 : i32
    return %arg0, %c0_i32, %c0_i32_0 : i32, i32, i32
  }
  func.func @transform_2(%arg0: i32) -> (i32, i32) {
    %c0_i32 = arith.constant 0 : i32
    %c0_i32_0 = arith.constant 0 : i32
    %c0_i32_1 = arith.constant 0 : i32
    return %c0_i32, %c0_i32_0 : i32, i32
  }
  func.func @transform_3(%arg0: i32) -> (i32, i32) {
    %c0_i32 = arith.constant 0 : i32
    %c0_i32_0 = arith.constant 0 : i32
    %c0_i32_1 = arith.constant 0 : i32
    return %c0_i32, %c0_i32_0 : i32, i32
  }
  func.func @transform_4(%arg0: i32) -> (i32, i32) {
    %c0_i32 = arith.constant 0 : i32
    %c0_i32_0 = arith.constant 0 : i32
    %c0_i32_1 = arith.constant 0 : i32
    return %c0_i32, %c0_i32_0 : i32, i32
  }
  func.func @transform_5(%arg0: i32) -> (i32, i32) {
    %c0_i32 = arith.constant 0 : i32
    %c0_i32_0 = arith.constant 0 : i32
    %c0_i32_1 = arith.constant 0 : i32
    return %c0_i32, %c0_i32_0 : i32, i32
  }
  func.func @transform_6(%arg0: i32) -> (i32, i32) {
    %c0_i32 = arith.constant 0 : i32
    %c0_i32_0 = arith.constant 0 : i32
    %c0_i32_1 = arith.constant 0 : i32
    return %c0_i32, %c0_i32_0 : i32, i32
  }
  func.func @transform_7(%arg0: i32) -> (i32, i32) {
    %c0_i32 = arith.constant 0 : i32
    %c0_i32_0 = arith.constant 0 : i32
    %c0_i32_1 = arith.constant 0 : i32
    return %c0_i32, %c0_i32_0 : i32, i32
  }
  func.func @transform_8(%arg0: i32) -> (i32, i32) {
    %c0_i32 = arith.constant 0 : i32
    %c0_i32_0 = arith.constant 0 : i32
    return %arg0, %c0_i32 : i32, i32
  }
  func.func @transform_9(%arg0: i32) -> (i32, i32) {
    %c0_i32 = arith.constant 0 : i32
    %c0_i32_0 = arith.constant 0 : i32
    return %arg0, %c0_i32 : i32, i32
  }
}

</mosaic_0001>

<llo_original>
// kernel: tpu_custom_call.1
$region0: #{tpu_custom_call.1}
  #allocation0 [shape = 'u32[]', space=smem, size = 0x4, offset = 0x4, fixed_abs, tag = 'smem constant byte address 0x4 - core index']
  #allocation1 [shape = 'u32[144,128]{1,0:T(1,128)}', space=vmem, size = 0x12000, scoped, tag = 'internal scratch']
  #allocation2 [shape = 'f32[1,1]{1,0:T(1,128)S(1)}', space=vmem, size = 0x200, scoped, tag = 'scoped memory for tpu_custom_call.1']
  %s0 = inlined_call_operand.vmem [shape: f32[2,16], index: 0, kind: input, shape index: {}]
  %s1 = inlined_call_operand.hbm [shape: f32[2,8,16], index: 1, kind: input, shape index: {}]
  %s2 = inlined_call_operand.hbm [shape: f32[16,32], index: 2, kind: input, shape index: {}]
  %s3 = inlined_call_operand.hbm [shape: f32[1,32], index: 3, kind: input, shape index: {}]
  %s4 = inlined_call_operand.vmem [shape: f32[16,64], index: 4, kind: input, shape index: {}]
  %s5 = inlined_call_operand.vmem [shape: f32[1,64], index: 5, kind: input, shape index: {}]
  %s6 = inlined_call_operand.vmem [shape: f32[1,32], index: 6, kind: input, shape index: {}]
  %s7 = inlined_call_operand.<no memory space> [shape: f32[1,1], index: 7, kind: input, shape index: {}]
  %s8 = inlined_call_operand.hbm [shape: f32[2,32], index: 8, kind: output, shape index: {0}]
  %s9 = inlined_call_operand.hbm [shape: f32[2,8], index: 9, kind: output, shape index: {1}]
  %10 = xla_tuple %s8, %s9
  %s11 = sld [smem:[#allocation0]]
  $region62: #{tpu_custom_call.1} parent=0
    _
  %s13 = ssub.s32 1, %s11
  %s14 = scalar_select 0, %s13, %s11
  %v15 = vstv %s7
  %16 = vst [vmem:[#allocation2] sm:$0x1] %v15
  $region1: #{tpu_custom_call.1} parent=0
    #allocation3 [shape = 'u8[8192]{0}', space=vmem, size = 0x2000, scoped, tag = 'input window, operand 1, single buffered']
    #allocation4 [shape = 's32[1]{0}', space=sflag, size = 0x4, scoped, tag = 'scoped memory for tpu_custom_call.1']
    #allocation5 [shape = 's32[1]{0}', space=sflag, size = 0x4, scoped, tag = 'scoped memory for tpu_custom_call.1']
    #allocation6 [shape = 'u8[8192]{0}', space=vmem, size = 0x2000, scoped, tag = 'input window, operand 2, single buffered']
    #allocation7 [shape = 's32[1]{0}', space=sflag, size = 0x4, scoped, tag = 'scoped memory for tpu_custom_call.1']
    #allocation8 [shape = 'u8[512]{0}', space=vmem, size = 0x400, scoped, tag = 'input window, operand 3, single buffered']
    #allocation9 [shape = 'u8[1024]{0}', space=vmem, size = 0x400, scoped, tag = 'output window, operand 0, single buffered']
    #allocation10 [shape = 'u8[1024]{0}', space=vmem, size = 0x400, scoped, tag = 'output window, operand 1, single buffered']
    #allocation11 [shape = 's32[1]{0}', space=sflag, size = 0x4, scoped, tag = 'scoped memory for tpu_custom_call.1']
    %17 = vsyncpa [#allocation4], 0
    %18 = vsyncpa [#allocation7], 0
    %19 = vsyncpa [#allocation5], 0
    %20 = vsyncpa [#allocation11], 0
    // Predicated region
    $region2: #{tpu_custom_call.1} parent=1 // pred_check
      _
    $region3: #{tpu_custom_call.1} parent=1 // pred_check_branch
      %22 = sbr.rel (0) target = $region5
    $region4: #{tpu_custom_call.1} parent=1 // pred_region
      _
    $region5: #{tpu_custom_call.1} parent=1 // pred_fallthru
      _
    // Predicated region
    $region6: #{tpu_custom_call.1} parent=1 // pred_check
      _
    $region7: #{tpu_custom_call.1} parent=1 // pred_check_branch
      %24 = sbr.rel (0) target = $region9
    $region8: #{tpu_custom_call.1} parent=1 // pred_region
      %s26 = ssub.s32 256, 256
      %27 = vsyncadd [#allocation4], %s26
      %s28 = sshll.u32 [#allocation3], 4
      %s29 = int_to_ptr.vmem [resolvable:$true] %s28
      %34 = dma.hbm_to_vmem [thread:$0]  %s1, 256, %s29, [#allocation4], 128, 128, 8
    $region9: #{tpu_custom_call.1} parent=1 // pred_fallthru
      _
    // Predicated region
    $region10: #{tpu_custom_call.1} parent=1 // pred_check
      _
    $region11: #{tpu_custom_call.1} parent=1 // pred_check_branch
      %36 = sbr.rel (0) target = $region13
    $region12: #{tpu_custom_call.1} parent=1 // pred_region
      %s38 = ssub.s32 256, 256
      %39 = vsyncadd [#allocation7], %s38
      %s40 = sshll.u32 [#allocation6], 4
      %s41 = int_to_ptr.vmem [resolvable:$true] %s40
      %46 = dma.hbm_to_vmem [thread:$0]  %s2, 256, %s41, [#allocation7], 128, 128, 8
    $region13: #{tpu_custom_call.1} parent=1 // pred_fallthru
      _
    // Predicated region
    $region14: #{tpu_custom_call.1} parent=1 // pred_check
      _
    $region15: #{tpu_custom_call.1} parent=1 // pred_check_branch
      %48 = sbr.rel (0) target = $region17
    $region16: #{tpu_custom_call.1} parent=1 // pred_region
      %s50 = ssub.s32 16, 16
      %51 = vsyncadd [#allocation7], %s50
      %s53 = sshll.u32 [#allocation8], 4
      %s54 = int_to_ptr.vmem [resolvable:$true] %s53
      %56 = dma.hbm_to_vmem [thread:$0]  %s3, 16, %s54, [#allocation7]
    $region17: #{tpu_custom_call.1} parent=1 // pred_fallthru
      _
    // Predicated region
    $region18: #{tpu_custom_call.1} parent=1 // pred_check
      _
    $region19: #{tpu_custom_call.1} parent=1 // pred_check_branch
      %58 = sbr.rel (0) target = $region21
    $region20: #{tpu_custom_call.1} parent=1 // pred_region
      _
    $region21: #{tpu_custom_call.1} parent=1 // pred_fallthru
      _
    // Predicated region
    $region22: #{tpu_custom_call.1} parent=1 // pred_check
      _
    $region23: #{tpu_custom_call.1} parent=1 // pred_check_branch
      %60 = sbr.rel (0) target = $region25
    $region24: #{tpu_custom_call.1} parent=1 // pred_region
      _
    $region25: #{tpu_custom_call.1} parent=1 // pred_fallthru
      _
    // Predicated region
    $region26: #{tpu_custom_call.1} parent=1 // pred_check
      _
    $region27: #{tpu_custom_call.1} parent=1 // pred_check_branch
      %62 = sbr.rel (0) target = $region29
    $region28: #{tpu_custom_call.1} parent=1 // pred_region
      _
    $region29: #{tpu_custom_call.1} parent=1 // pred_fallthru
      _
    // Predicated region
    $region30: #{tpu_custom_call.1} parent=1 // pred_check
      _
    $region31: #{tpu_custom_call.1} parent=1 // pred_check_branch
      %64 = sbr.rel (0) target = $region33
    $region32: #{tpu_custom_call.1} parent=1 // pred_region
      _
    $region33: #{tpu_custom_call.1} parent=1 // pred_fallthru
      _
    // Predicated region
    $region34: #{tpu_custom_call.1} parent=1 // pred_check
      _
    $region35: #{tpu_custom_call.1} parent=1 // pred_check_branch
      %66 = sbr.rel (0) target = $region37
    $region36: #{tpu_custom_call.1} parent=1 // pred_region
      %67 = dma.done [#allocation4], 256
    $region37: #{tpu_custom_call.1} parent=1 // pred_fallthru
      _
    // Predicated region
    $region38: #{tpu_custom_call.1} parent=1 // pred_check
      _
    $region39: #{tpu_custom_call.1} parent=1 // pred_check_branch
      %69 = sbr.rel (0) target = $region41
    $region40: #{tpu_custom_call.1} parent=1 // pred_region
      %70 = dma.done [#allocation7], 256
    $region41: #{tpu_custom_call.1} parent=1 // pred_fallthru
      _
    // Predicated region
    $region42: #{tpu_custom_call.1} parent=1 // pred_check
      _
    $region43: #{tpu_custom_call.1} parent=1 // pred_check_branch
      %72 = sbr.rel (0) target = $region45
    $region44: #{tpu_custom_call.1} parent=1 // pred_region
      %73 = dma.done [#allocation7], 16
    $region45: #{tpu_custom_call.1} parent=1 // pred_fallthru
      _
    %v74 = vld [vmem:[%s0] sm:$0x3]
    %v75 = vld [vmem:[#allocation3] sm:$0xff]
    %v76 = vld [vmem:[#allocation3 + $0x8] sm:$0xff]
    %v77 = vld [vmem:[#allocation6] sm:$0xff]
    %v78 = vld [vmem:[#allocation6 + $0x8] sm:$0xff]
    %v79 = vld [vmem:[#allocation8] sm:$0x1]
    %v81 = vlaneseq
    %v82 = vshrl.u32 %v81, 7
    %v83 = vsub.s32 0, %v82
    %v84 = vrot.slane %v79, %v83
    %vm86 = vcmask 130048
    %v88 = vsel %vm86, %v74, 0
    %90 = vmatprep.subr.mxu0 0.0
    %91 = vmatpush1.msra.mxu0 %v77
    %92 = vmatprep.subr.mxu0 0.0
    %93 = vmatpush1.msra.mxu0 %v78
    %94 = vmatprep.subr.mxu0 0.0
    %95 = vmatpush1.msra.mxu0 0.0
    %96 = vmatprep.subr.mxu0 0.0
    %97 = vmatpush1.msra.mxu0 0.0
    %98 = vmatprep.subr.mxu0 0.0
    %99 = vmatpush1.msra.mxu0 0.0
    %100 = vmatprep.subr.mxu0 0.0
    %101 = vmatpush1.msra.mxu0 0.0
    %102 = vmatprep.subr.mxu0 0.0
    %103 = vmatpush1.msra.mxu0 0.0
    %104 = vmatprep.subr.mxu0 0.0
    %105 = vmatpush1.msra.mxu0 0.0
    %106 = vmatprep.subr.mxu0 0.0
    %107 = vmatpush1.msra.mxu0 0.0
    %108 = vmatprep.subr.mxu0 0.0
    %109 = vmatpush1.msra.mxu0 0.0
    %110 = vmatprep.subr.mxu0 0.0
    %111 = vmatpush1.msra.mxu0 0.0
    %112 = vmatprep.subr.mxu0 0.0
    %113 = vmatpush1.msra.mxu0 0.0
    %114 = vmatprep.subr.mxu0 0.0
    %115 = vmatpush1.msra.mxu0 0.0
    %116 = vmatprep.subr.mxu0 0.0
    %117 = vmatpush1.msra.mxu0 0.0
    %118 = vmatprep.subr.mxu0 0.0
    %119 = vmatpush1.msra.mxu0 0.0
    %120 = vmatprep.subr.mxu0 0.0
    %121 = vmatpush1.msra.mxu0 0.0
    %122 = vmatprep.subr.mxu0 0.0
    %123 = vmatpush1.msra.mxu0 0.0
    %124 = vmatprep.subr.mxu0 0.0
    %125 = vmatpush1.msra.mxu0 0.0
    %126 = vmatprep.subr.mxu0 0.0
    %127 = vmatpush1.msra.mxu0 0.0
    %128 = vmatprep.subr.mxu0 0.0
    %129 = vmatpush1.msra.mxu0 0.0
    %130 = vmatprep.subr.mxu0 0.0
    %131 = vmatpush1.msra.mxu0 0.0
    %132 = vmatprep.subr.mxu0 0.0
    %133 = vmatpush1.msra.mxu0 0.0
    %134 = vmatprep.subr.mxu0 0.0
    %135 = vmatpush1.msra.mxu0 0.0
    %136 = vmatprep.subr.mxu0 0.0
    %137 = vmatpush1.msra.mxu0 0.0
    %138 = vmatprep.subr.mxu0 0.0
    %139 = vmatpush1.msra.mxu0 0.0
    %140 = vmatprep.subr.mxu0 0.0
    %141 = vmatpush1.msra.mxu0 0.0
    %142 = vmatprep.subr.mxu0 0.0
    %143 = vmatpush1.msra.mxu0 0.0
    %144 = vmatprep.subr.mxu0 0.0
    %145 = vmatpush1.msra.mxu0 0.0
    %146 = vmatprep.subr.mxu0 0.0
    %147 = vmatpush1.msra.mxu0 0.0
    %148 = vmatprep.subr.mxu0 0.0
    %149 = vmatpush1.msra.mxu0 0.0
    %150 = vmatprep.subr.mxu0 0.0
    %151 = vmatpush1.msra.mxu0 0.0
    %152 = vmatprep.subr.mxu0 0.0
    %153 = vmatpush1.msra.mxu0 0.0
    %154 = vmatprep.mubr.f32.mxu0 0.0
    %155 = vmatmul.mubr.f32.gmra.mrb[0].mxu0 %v88
    %v156 = vpop.f32.mrb[0].mxu0
    %v157 = vadd.f32 %v84, %v156
    %v158 = vpop.f32.mrb[0].mxu0
    %159 = vdwg.mxu0
    %v160 = vld [vmem:[%s4] sm:$0xff]
    %v161 = vld [vmem:[%s4 + $0x8] sm:$0xff]
    %v162 = vld [vmem:[%s5] sm:$0x1]
    %v164 = vlaneseq
    %v165 = vshrl.u32 %v164, 7
    %v166 = vsub.s32 0, %v165
    %v167 = vrot.slane %v162, %v166
    %v170 = vsel %vm86, %v75, 0
    %v173 = vsel %vm86, %v76, 0
    %175 = vmatprep.subr.mxu0 0.0
    %176 = vmatpush1.msra.mxu0 %v160
    %177 = vmatprep.subr.mxu0 0.0
    %178 = vmatpush1.msra.mxu0 %v161
    %179 = vmatprep.subr.mxu0 0.0
    %180 = vmatpush1.msra.mxu0 0.0
    %181 = vmatprep.subr.mxu0 0.0
    %182 = vmatpush1.msra.mxu0 0.0
    %183 = vmatprep.subr.mxu0 0.0
    %184 = vmatpush1.msra.mxu0 0.0
    %185 = vmatprep.subr.mxu0 0.0
    %186 = vmatpush1.msra.mxu0 0.0
    %187 = vmatprep.subr.mxu0 0.0
    %188 = vmatpush1.msra.mxu0 0.0
    %189 = vmatprep.subr.mxu0 0.0
    %190 = vmatpush1.msra.mxu0 0.0
    %191 = vmatprep.subr.mxu0 0.0
    %192 = vmatpush1.msra.mxu0 0.0
    %193 = vmatprep.subr.mxu0 0.0
    %194 = vmatpush1.msra.mxu0 0.0
    %195 = vmatprep.subr.mxu0 0.0
    %196 = vmatpush1.msra.mxu0 0.0
    %197 = vmatprep.subr.mxu0 0.0
    %198 = vmatpush1.msra.mxu0 0.0
    %199 = vmatprep.subr.mxu0 0.0
    %200 = vmatpush1.msra.mxu0 0.0
    %201 = vmatprep.subr.mxu0 0.0
    %202 = vmatpush1.msra.mxu0 0.0
    %203 = vmatprep.subr.mxu0 0.0
    %204 = vmatpush1.msra.mxu0 0.0
    %205 = vmatprep.subr.mxu0 0.0
    %206 = vmatpush1.msra.mxu0 0.0
    %207 = vmatprep.subr.mxu0 0.0
    %208 = vmatpush1.msra.mxu0 0.0
    %209 = vmatprep.subr.mxu0 0.0
    %210 = vmatpush1.msra.mxu0 0.0
    %211 = vmatprep.subr.mxu0 0.0
    %212 = vmatpush1.msra.mxu0 0.0
    %213 = vmatprep.subr.mxu0 0.0
    %214 = vmatpush1.msra.mxu0 0.0
    %215 = vmatprep.subr.mxu0 0.0
    %216 = vmatpush1.msra.mxu0 0.0
    %217 = vmatprep.subr.mxu0 0.0
    %218 = vmatpush1.msra.mxu0 0.0
    %219 = vmatprep.subr.mxu0 0.0
    %220 = vmatpush1.msra.mxu0 0.0
    %221 = vmatprep.subr.mxu0 0.0
    %222 = vmatpush1.msra.mxu0 0.0
    %223 = vmatprep.subr.mxu0 0.0
    %224 = vmatpush1.msra.mxu0 0.0
    %225 = vmatprep.subr.mxu0 0.0
    %226 = vmatpush1.msra.mxu0 0.0
    %227 = vmatprep.subr.mxu0 0.0
    %228 = vmatpush1.msra.mxu0 0.0
    %229 = vmatprep.subr.mxu0 0.0
    %230 = vmatpush1.msra.mxu0 0.0
    %231 = vmatprep.subr.mxu0 0.0
    %232 = vmatpush1.msra.mxu0 0.0
    %233 = vmatprep.subr.mxu0 0.0
    %234 = vmatpush1.msra.mxu0 0.0
    %235 = vmatprep.subr.mxu0 0.0
    %236 = vmatpush1.msra.mxu0 0.0
    %237 = vmatprep.subr.mxu0 0.0
    %238 = vmatpush1.msra.mxu0 0.0
    %239 = vmatprep.mubr.f32.mxu0 0.0
    %240 = vmatmul.mubr.f32.gmra.mrb[0].mxu0 %v170
    %v241 = vpop.f32.mrb[0].mxu0
    %v242 = vadd.f32 %v167, %v241
    %v243 = vpop.f32.mrb[0].mxu0
    %244 = vmatprep.mubr.f32.mxu0 0.0
    %245 = vmatmul.mubr.f32.gmra.mrb[0].mxu0 %v173
    %v246 = vpop.f32.mrb[0].mxu0
    %v247 = vadd.f32 %v167, %v246
    %v248 = vpop.f32.mrb[0].mxu0
    %249 = vdwg.mxu0
    %v252 = vunpack.c.l.s4 1966171168
    %v253 = vunpack.c.0.s8 %v252
    %v254 = vlaneseq
    %v255 = vshrl.u32 %v254, 7
    %v256 = vsub.s32 %v253, %v255
    %v257 = vrot.slane %v157, %v256
    %v258 = vcombine.high %v257, %v257
    %v260 = vunpack.c.l.s4 1966171168
    %v261 = vunpack.c.0.s8 %v260
    %v262 = vlaneseq
    %v263 = vshrl.u32 %v262, 7
    %v264 = vsub.s32 %v261, %v263
    %v265 = vrot.slane %v257, %v264
    %v267 = vunpack.c.l.s4 1966171168
    %v268 = vunpack.c.0.s8 %v267
    %v269 = vlaneseq
    %v270 = vshrl.u32 %v269, 7
    %v271 = vsub.s32 %v268, %v270
    %v272 = vrot.slane %v258, %v271
    %v273 = vlaneseq
    %v274 = vshrl.u32 %v273, 7
    %v275 = vsub.s32 0, %v274
    %v276 = vrot.slane %v265, %v275
    %v277 = vlaneseq
    %v278 = vshrl.u32 %v277, 7
    %v279 = vsub.s32 0, %v278
    %v280 = vrot.slane %v272, %v279
    %v283 = vadd.f32 %v276, %v242
    %v284 = vadd.f32 %v280, %v247
    %v285 = vtanh.pop %v283
    %v286 = vtanh.pop %v284
    %v287 = vld [vmem:[%s6] sm:$0x1]
    %v289 = vlaneseq
    %v290 = vshrl.u32 %v289, 7
    %v291 = vsub.s32 0, %v290
    %v292 = vrot.slane %v287, %v291
    %v294 = vmul.f32 %v285, %v292
    %v295 = vmul.f32 %v286, %v292
    %vm296 = vcmask 261120
    %v297 = vsel %vm296, %v294, 0.0
    %298 = vadd.xlane.f32.xlu0 %v297
    %v299 = vpop.xlane.xlu0 %298
    %v300 = vsel %vm296, %v295, 0.0
    %301 = vadd.xlane.f32.xlu0 %v300
    %v302 = vpop.xlane.xlu0 %301
    %v303 = vld [vmem:[#allocation2] sm:$0x1]
    %v305 = vlaneseq
    %v306 = vshrl.u32 %v305, 7
    %v307 = vsub.s32 0, %v306
    %v308 = vrot.slane %v303, %v307
    %309 = vset.pattern.permute.xlu0 0
    %310 = vperm.xlu0 %309, %v308
    %v311 = vpop.permute.xlu0 %310
    %v313 = vadd.f32 %v299, %v311
    %v314 = vadd.f32 %v302, %v311
    %v317 = vlaneseq
    %v318 = vand.u32 %v317, 127
    %v319 = vlaneseq
    %v320 = vshrl.u32 %v319, 7
    %v321 = vsub.s32 %v318, %v320
    %v322 = vrot.slane %v313, %v321
    %v323 = vlaneseq
    %v324 = vshrl.u32 %v323, 7
    %v325 = vsub.s32 %v318, %v324
    %v326 = vrot.slane %v314, %v325
    %vm327 = vcmask 1041409
    %v328 = vsel %vm327, %v326, %v322
    %vm330 = vcmask 58368
    %v331 = vsel %vm330, %v328, -inf
    %332 = vmax.xlane.f32.xlu0 %v331
    %v333 = vpop.xlane.xlu0 %332
    %v335 = vlaneseq
    %v336 = vshrl.u32 %v335, 7
    %v337 = vsub.s32 0, %v336
    %v338 = vrot.slane %v333, %v337
    %v339 = vlaneseq
    %v340 = vshrl.u32 %v339, 7
    %v341 = vsub.s32 1, %v340
    %v342 = vrot.slane %v333, %v341
    %v345 = vsub.f32 %v313, %v338
    %v346 = vsub.f32 %v314, %v342
    %v347 = vmul.f32 %v345, 1.442695
    %v348 = vpow.pop %v347
    %v349 = vmul.f32 %v346, 1.442695
    %v350 = vpow.pop %v349
    %353 = vset.pattern.permute.xlu0 0
    %354 = vperm.xlu0 %353, %v348
    %v355 = vpop.permute.xlu0 %354
    %356 = vset.pattern.permute.xlu0 0
    %357 = vperm.xlu0 %356, %v350
    %v358 = vpop.permute.xlu0 %357
    %v359 = vlaneseq
    %v360 = vshrl.u32 %v359, 7
    %v361 = vsub.s32 %v318, %v360
    %v362 = vrot.slane %v355, %v361
    %v363 = vlaneseq
    %v364 = vshrl.u32 %v363, 7
    %v365 = vsub.s32 %v318, %v364
    %v366 = vrot.slane %v358, %v365
    %v367 = vsel %vm327, %v366, %v362
    %v369 = vsel %vm330, %v367, 0.0
    %370 = vadd.xlane.f32.xlu0 %v369
    %v371 = vpop.xlane.xlu0 %370
    %v372 = vrcp.pop %v371
    %v374 = vlaneseq
    %v375 = vshrl.u32 %v374, 7
    %v376 = vsub.s32 0, %v375
    %v377 = vrot.slane %v372, %v376
    %v378 = vlaneseq
    %v379 = vshrl.u32 %v378, 7
    %v380 = vsub.s32 1, %v379
    %v381 = vrot.slane %v372, %v380
    %v384 = vmul.f32 %v348, %v377
    %v385 = vmul.f32 %v350, %v381
    %387 = vset.pattern.permute.xlu0 0
    %388 = vperm.xlu0 %387, %v384
    %v389 = vpop.permute.xlu0 %388
    %v390 = vlaneseq
    %v391 = vshrl.u32 %v390, 7
    %v392 = vsub.s32 %v318, %v391
    %v393 = vrot.slane %v389, %v392
    %395 = vrot.lane.b32.xlu0 %v242, 96
    %v396 = vpop.permute.xlu0 %395
    %vm398 = vcmask 64512
    %v399 = vsel %vm398, %v393, 0
    %401 = vmatprep.subr.mxu0 0.0
    %402 = vmatpush1.msra.mxu0 %v396
    %403 = vmatprep.subr.mxu0 0.0
    %404 = vmatpush1.msra.mxu0 0.0
    %405 = vmatprep.subr.mxu0 0.0
    %406 = vmatpush1.msra.mxu0 0.0
    %407 = vmatprep.subr.mxu0 0.0
    %408 = vmatpush1.msra.mxu0 0.0
    %409 = vmatprep.subr.mxu0 0.0
    %410 = vmatpush1.msra.mxu0 0.0
    %411 = vmatprep.subr.mxu0 0.0
    %412 = vmatpush1.msra.mxu0 0.0
    %413 = vmatprep.subr.mxu0 0.0
    %414 = vmatpush1.msra.mxu0 0.0
    %415 = vmatprep.subr.mxu0 0.0
    %416 = vmatpush1.msra.mxu0 0.0
    %417 = vmatprep.subr.mxu0 0.0
    %418 = vmatpush1.msra.mxu0 0.0
    %419 = vmatprep.subr.mxu0 0.0
    %420 = vmatpush1.msra.mxu0 0.0
    %421 = vmatprep.subr.mxu0 0.0
    %422 = vmatpush1.msra.mxu0 0.0
    %423 = vmatprep.subr.mxu0 0.0
    %424 = vmatpush1.msra.mxu0 0.0
    %425 = vmatprep.subr.mxu0 0.0
    %426 = vmatpush1.msra.mxu0 0.0
    %427 = vmatprep.subr.mxu0 0.0
    %428 = vmatpush1.msra.mxu0 0.0
    %429 = vmatprep.subr.mxu0 0.0
    %430 = vmatpush1.msra.mxu0 0.0
    %431 = vmatprep.subr.mxu0 0.0
    %432 = vmatpush1.msra.mxu0 0.0
    %433 = vmatprep.subr.mxu0 0.0
    %434 = vmatpush1.msra.mxu0 0.0
    %435 = vmatprep.subr.mxu0 0.0
    %436 = vmatpush1.msra.mxu0 0.0
    %437 = vmatprep.subr.mxu0 0.0
    %438 = vmatpush1.msra.mxu0 0.0
    %439 = vmatprep.subr.mxu0 0.0
    %440 = vmatpush1.msra.mxu0 0.0
    %441 = vmatprep.subr.mxu0 0.0
    %442 = vmatpush1.msra.mxu0 0.0
    %443 = vmatprep.subr.mxu0 0.0
    %444 = vmatpush1.msra.mxu0 0.0
    %445 = vmatprep.subr.mxu0 0.0
    %446 = vmatpush1.msra.mxu0 0.0
    %447 = vmatprep.subr.mxu0 0.0
    %448 = vmatpush1.msra.mxu0 0.0
    %449 = vmatprep.subr.mxu0 0.0
    %450 = vmatpush1.msra.mxu0 0.0
    %451 = vmatprep.subr.mxu0 0.0
    %452 = vmatpush1.msra.mxu0 0.0
    %453 = vmatprep.subr.mxu0 0.0
    %454 = vmatpush1.msra.mxu0 0.0
    %455 = vmatprep.subr.mxu0 0.0
    %456 = vmatpush1.msra.mxu0 0.0
    %457 = vmatprep.subr.mxu0 0.0
    %458 = vmatpush1.msra.mxu0 0.0
    %459 = vmatprep.subr.mxu0 0.0
    %460 = vmatpush1.msra.mxu0 0.0
    %461 = vmatprep.subr.mxu0 0.0
    %462 = vmatpush1.msra.mxu0 0.0
    %463 = vmatprep.subr.mxu0 0.0
    %464 = vmatpush1.msra.mxu0 0.0
    %465 = vmatprep.mubr.f32.mxu0 0.0
    %466 = vmatmul.mubr.f32.gmra.mrb[0].mxu0 %v399
    %v467 = vpop.f32.mrb[0].mxu0
    %v468 = vadd.f32 0.0, %v467
    %v469 = vpop.f32.mrb[0].mxu0
    %470 = vdwg.mxu0
    %472 = vset.pattern.permute.xlu0 0
    %473 = vperm.xlu0 %472, %v385
    %v474 = vpop.permute.xlu0 %473
    %v475 = vlaneseq
    %v476 = vshrl.u32 %v475, 7
    %v477 = vsub.s32 %v318, %v476
    %v478 = vrot.slane %v474, %v477
    %480 = vrot.lane.b32.xlu0 %v247, 96
    %v481 = vpop.permute.xlu0 %480
    %v483 = vsel %vm398, %v478, 0
    %485 = vmatprep.subr.mxu0 0.0
    %486 = vmatpush1.msra.mxu0 %v481
    %487 = vmatprep.subr.mxu0 0.0
    %488 = vmatpush1.msra.mxu0 0.0
    %489 = vmatprep.subr.mxu0 0.0
    %490 = vmatpush1.msra.mxu0 0.0
    %491 = vmatprep.subr.mxu0 0.0
    %492 = vmatpush1.msra.mxu0 0.0
    %493 = vmatprep.subr.mxu0 0.0
    %494 = vmatpush1.msra.mxu0 0.0
    %495 = vmatprep.subr.mxu0 0.0
    %496 = vmatpush1.msra.mxu0 0.0
    %497 = vmatprep.subr.mxu0 0.0
    %498 = vmatpush1.msra.mxu0 0.0
    %499 = vmatprep.subr.mxu0 0.0
    %500 = vmatpush1.msra.mxu0 0.0
    %501 = vmatprep.subr.mxu0 0.0
    %502 = vmatpush1.msra.mxu0 0.0
    %503 = vmatprep.subr.mxu0 0.0
    %504 = vmatpush1.msra.mxu0 0.0
    %505 = vmatprep.subr.mxu0 0.0
    %506 = vmatpush1.msra.mxu0 0.0
    %507 = vmatprep.subr.mxu0 0.0
    %508 = vmatpush1.msra.mxu0 0.0
    %509 = vmatprep.subr.mxu0 0.0
    %510 = vmatpush1.msra.mxu0 0.0
    %511 = vmatprep.subr.mxu0 0.0
    %512 = vmatpush1.msra.mxu0 0.0
    %513 = vmatprep.subr.mxu0 0.0
    %514 = vmatpush1.msra.mxu0 0.0
    %515 = vmatprep.subr.mxu0 0.0
    %516 = vmatpush1.msra.mxu0 0.0
    %517 = vmatprep.subr.mxu0 0.0
    %518 = vmatpush1.msra.mxu0 0.0
    %519 = vmatprep.subr.mxu0 0.0
    %520 = vmatpush1.msra.mxu0 0.0
    %521 = vmatprep.subr.mxu0 0.0
    %522 = vmatpush1.msra.mxu0 0.0
    %523 = vmatprep.subr.mxu0 0.0
    %524 = vmatpush1.msra.mxu0 0.0
    %525 = vmatprep.subr.mxu0 0.0
    %526 = vmatpush1.msra.mxu0 0.0
    %527 = vmatprep.subr.mxu0 0.0
    %528 = vmatpush1.msra.mxu0 0.0
    %529 = vmatprep.subr.mxu0 0.0
    %530 = vmatpush1.msra.mxu0 0.0
    %531 = vmatprep.subr.mxu0 0.0
    %532 = vmatpush1.msra.mxu0 0.0
    %533 = vmatprep.subr.mxu0 0.0
    %534 = vmatpush1.msra.mxu0 0.0
    %535 = vmatprep.subr.mxu0 0.0
    %536 = vmatpush1.msra.mxu0 0.0
    %537 = vmatprep.subr.mxu0 0.0
    %538 = vmatpush1.msra.mxu0 0.0
    %539 = vmatprep.subr.mxu0 0.0
    %540 = vmatpush1.msra.mxu0 0.0
    %541 = vmatprep.subr.mxu0 0.0
    %542 = vmatpush1.msra.mxu0 0.0
    %543 = vmatprep.subr.mxu0 0.0
    %544 = vmatpush1.msra.mxu0 0.0
    %545 = vmatprep.subr.mxu0 0.0
    %546 = vmatpush1.msra.mxu0 0.0
    %547 = vmatprep.subr.mxu0 0.0
    %548 = vmatpush1.msra.mxu0 0.0
    %549 = vmatprep.mubr.f32.mxu0 0.0
    %550 = vmatmul.mubr.f32.gmra.mrb[0].mxu0 %v483
    %v551 = vpop.f32.mrb[0].mxu0
    %v552 = vadd.f32 0.0, %v551
    %v553 = vpop.f32.mrb[0].mxu0
    %554 = vdwg.mxu0
    %v557 = vrot.slane %v552, 7
    %v558 = vsel %vm327, %v557, %v468
    %vm560 = vcmask 254976
    %561 = vst.msk [vmem:[#allocation9] sm:$0x3] %vm560, %v558
    %v562 = vsel %vm327, %v478, %v393
    %564 = vst.msk [vmem:[#allocation10] sm:$0x3] %vm330, %v562
    // Predicated region
    $region46: #{tpu_custom_call.1} parent=1 // pred_check
      _
    $region47: #{tpu_custom_call.1} parent=1 // pred_check_branch
      %566 = sbr.rel (0) target = $region49
    $region48: #{tpu_custom_call.1} parent=1 // pred_region
      %s568 = ssub.s32 32, 32
      %569 = vsyncadd [#allocation5], %s568
      %s571 = sshll.u32 [#allocation9], 4
      %s572 = int_to_ptr.vmem [resolvable:$true] %s571
      %574 = dma.vmem_to_hbm [thread:$0]  %s572, 32, %s8, [#allocation5]
    $region49: #{tpu_custom_call.1} parent=1 // pred_fallthru
      _
    // Predicated region
    $region50: #{tpu_custom_call.1} parent=1 // pred_check
      _
    $region51: #{tpu_custom_call.1} parent=1 // pred_check_branch
      %576 = sbr.rel (0) target = $region53
    $region52: #{tpu_custom_call.1} parent=1 // pred_region
      %s578 = ssub.s32 32, 32
      %579 = vsyncadd [#allocation11], %s578
      %s581 = sshll.u32 [#allocation10], 4
      %s582 = int_to_ptr.vmem [resolvable:$true] %s581
      %584 = dma.vmem_to_hbm [thread:$0]  %s582, 32, %s9, [#allocation11]
    $region53: #{tpu_custom_call.1} parent=1 // pred_fallthru
      _
    // Predicated region
    $region54: #{tpu_custom_call.1} parent=1 // pred_check
      _
    $region55: #{tpu_custom_call.1} parent=1 // pred_check_branch
      %586 = sbr.rel (0) target = $region57
    $region56: #{tpu_custom_call.1} parent=1 // pred_region
      %587 = dma.done [#allocation5], 32
    $region57: #{tpu_custom_call.1} parent=1 // pred_fallthru
      _
    // Predicated region
    $region58: #{tpu_custom_call.1} parent=1 // pred_check
      _
    $region59: #{tpu_custom_call.1} parent=1 // pred_check_branch
      %589 = sbr.rel (0) target = $region61
    $region60: #{tpu_custom_call.1} parent=1 // pred_region
      %590 = dma.done [#allocation11], 32
    $region61: #{tpu_custom_call.1} parent=1 // pred_fallthru
      _
    %591 = vsyncpa [#allocation4], 1
    %592 = vsyncpa [#allocation7], 1
    %593 = vsyncpa [#allocation5], 1
    %594 = vsyncpa [#allocation11], 1

</llo_original>
